<compile_context>
chip_gen: v7x
topology: tpu7x:2x2x1
jax: 0.10.0
libtpu: 0.0.40
codegen_flags: <defaults>
</compile_context>

<pallas_src>
import jax
import jax.numpy as jnp
from jax.experimental import pallas as pl
from jax.experimental.pallas import tpu as pltpu

BETA_MIN = 0.0001
BETA_INIT = 0.1


def beta_network_forward_inline(beta_param: jax.Array) -> jax.Array:
    """Recommended production path: plain JAX, fuses into the consumer."""
    return jnp.abs(beta_param) + BETA_MIN


def _beta_kernel(beta_ref, out_ref):
    # Pure scalar path: sld one f32 from SMEM, cmp+select for |.|, add, sst.
    b = beta_ref[0]
    abs_b = jnp.where(b < 0.0, 0.0 - b, b)
    out_ref[0] = abs_b + BETA_MIN


def beta_network_forward(beta_param: jax.Array) -> jax.Array:
    """beta_param: 0-d (or shape-(1,)) float32 learnable scalar. Returns 0-d scalar."""
    beta_1d = jnp.asarray(beta_param, dtype=jnp.float32).reshape(1)
    out = pl.pallas_call(
        _beta_kernel,
        out_shape=jax.ShapeDtypeStruct((1,), jnp.float32),
        in_specs=[pl.BlockSpec(memory_space=pltpu.SMEM)],
        out_specs=pl.BlockSpec(memory_space=pltpu.SMEM),
        cost_estimate=pl.CostEstimate(flops=2, transcendentals=0, bytes_accessed=8),
    )(beta_1d)
    return out.reshape(())


if __name__ == "__main__":
    # Deterministic parameter init mirroring nn.Parameter(torch.tensor(0.1)).
    # (PRNGKey only for determinism plumbing; the init value is fixed.)
    _ = jax.random.PRNGKey(0)
    beta_param = jnp.asarray(BETA_INIT, dtype=jnp.float32)

    result = jax.block_until_ready(beta_network_forward(beta_param))

    expected = abs(BETA_INIT) + BETA_MIN
    assert abs(float(result) - expected) < 1e-6, (float(result), expected)

    # The inline (fused) path must agree with the kernel path.
    inline = jax.block_until_ready(beta_network_forward_inline(beta_param))
    assert abs(float(inline) - expected) < 1e-6, (float(inline), expected)

    print("KERNEL_OK")
</pallas_src>

<mosaic_0001>
module attributes {stable_mosaic.version = 11 : i64} {
  func.func @_beta_kernel(%arg0: memref<1xf32, #tpu.memory_space<smem>>, %arg1: memref<1xf32, #tpu.memory_space<smem>>) attributes {dimension_semantics = [], scalar_prefetch = 0 : i64, scratch_operands = 0 : i64, tpu.core_type = #tpu.core_type<tc>} {
    %c0 = arith.constant 0 : index
    %0 = memref.load %arg0[%c0] : memref<1xf32, #tpu.memory_space<smem>>
    %cst = arith.constant 0.000000e+00 : f32
    %1 = arith.cmpf olt, %0, %cst : f32
    %cst_0 = arith.constant 0.000000e+00 : f32
    %2 = arith.subf %cst_0, %0 : f32
    %3 = arith.select %1, %2, %0 : f32
    %cst_1 = arith.constant 9.99999974E-5 : f32
    %4 = arith.addf %3, %cst_1 : f32
    %c0_2 = arith.constant 0 : index
    %5 = memref.load %arg1[%c0_2] : memref<1xf32, #tpu.memory_space<smem>>
    memref.store %4, %arg1[%c0_2] : memref<1xf32, #tpu.memory_space<smem>>
    return
  }
}

</mosaic_0001>

<llo_original>
// kernel: tpu_custom_call.1
$region0: #{tpu_custom_call.1}
  #allocation0 [shape = 'u32[]', space=smem, size = 0x4, offset = 0x4, fixed_abs, tag = 'smem constant byte address 0x4 - core index']
  #allocation1 [shape = 'u32[144,128]{1,0:T(1,128)}', space=vmem, size = 0x12000, scoped, tag = 'internal scratch']
  #allocation2 [shape = 'f32[1]{0:T(128)S(6)}', space=smem, size = 0x200, scoped, tag = 'scoped memory for tpu_custom_call.1']
  %s0 = inlined_call_operand.<no memory space> [shape: f32[1], index: 0, kind: input, shape index: {}]
  %s1 = inlined_call_operand.hbm [shape: f32[1], index: 1, kind: output, shape index: {}]
  %s2 = sld [smem:[#allocation0]]
  $region14: #{tpu_custom_call.1} parent=0
    _
  %s4 = ssub.s32 1, %s2
  %s5 = scalar_select 0, %s4, %s2
  %6 = sst [smem:[#allocation2]] %s0
  $region1: #{tpu_custom_call.1} parent=0
    #allocation3 [shape = 'u8[512]{0}', space=smem, size = 0x200, scoped, tag = 'output window, operand 0, single buffered']
    #allocation4 [shape = 's32[1]{0}', space=sflag, size = 0x4, scoped, tag = 'scoped memory for tpu_custom_call.1']
    %7 = vsyncpa [#allocation4], 0
    // Predicated region
    $region2: #{tpu_custom_call.1} parent=1 // pred_check
      _
    $region3: #{tpu_custom_call.1} parent=1 // pred_check_branch
      %9 = sbr.rel (0) target = $region5
    $region4: #{tpu_custom_call.1} parent=1 // pred_region
      _
    $region5: #{tpu_custom_call.1} parent=1 // pred_fallthru
      _
    %s10 = sld [smem:[#allocation2]]
    %p11 = scmp.lt.f32.partialorder %s10, 0.0
    %s12 = ssub.f32 0.0, %s10
    %s13 = scalar_select %p11, %s12, %s10
    %s14 = sadd.f32 %s13, 0.0001
    %s15 = scalar_lea.smem [#allocation3], 0
    %16 = sst [smem:[%s15]] %s14
    // Predicated region
    $region6: #{tpu_custom_call.1} parent=1 // pred_check
      _
    $region7: #{tpu_custom_call.1} parent=1 // pred_check_branch
      %18 = sbr.rel (0) target = $region9
    $region8: #{tpu_custom_call.1} parent=1 // pred_region
      %s20 = ssub.s32 16, 16
      %21 = vsyncadd [#allocation4], %s20
      %24 = dma.smem_to_hbm [#allocation3], 16, %s1, [#allocation4]
    $region9: #{tpu_custom_call.1} parent=1 // pred_fallthru
      _
    // Predicated region
    $region10: #{tpu_custom_call.1} parent=1 // pred_check
      _
    $region11: #{tpu_custom_call.1} parent=1 // pred_check_branch
      %26 = sbr.rel (0) target = $region13
    $region12: #{tpu_custom_call.1} parent=1 // pred_region
      %27 = dma.done [#allocation4], 16
    $region13: #{tpu_custom_call.1} parent=1 // pred_fallthru
      _
    %28 = sfence
    %29 = vsyncpa [#allocation4], 1

</llo_original>
